<compile_context>
chip_gen: v6e
topology: v6e:2x2x1
jax: 0.10.0
libtpu: 0.0.40
codegen_flags: <defaults>
</compile_context>

<pallas_src>
import numpy as np
import jax
import jax.numpy as jnp
from jax.experimental import pallas as pl
from jax.experimental.pallas import tpu as pltpu

# Module constants fixed by the PyTorch definition.
CO = 20     # Conv1d(ref_dim, 20, kernel_size=3)
HID = 8     # LSTMCell(..., 8), Linear(8, nr_actions_predict)
LANE = 128


def _round_up(x, m):
    return (x + m - 1) // m * m


def make_layout(S, H, R, A):
    """All lane offsets / widths for the packed activation & weight slabs."""
    T = H - 2
    K_G0 = _round_up(H * R + 1, LANE)               # acts group 0: ref_flat | 1
    N1 = _round_up(T * CO + S + HID + 1, LANE)      # hidden1 width (conv | direct)
    HG = _round_up(HID, LANE)                       # one gate / h / c group
    NG = 4 * HG                                     # gates: [i | f | o | g]
    FCW = _round_up(A, LANE)                        # fc_out group
    return dict(
        S=S, H=H, R=R, A=A, T=T,
        K_G0=K_G0, N1=N1, HG=HG, NG=NG, FCW=FCW,
        CONV_ONE=H * R,                 # const-1 lane inside acts group 0 (conv bias)
        DIR_OFF=T * CO,                 # [state|h0|1] offset inside hidden1 space
        K_ACTS=K_G0 + N1 + HG,          # acts width: ref grp | direct grp | c0 grp
        W2_OFF=N1, FC_OFF=N1 + NG,
        W_ROWS=max(K_G0, N1, HG),
        W_COLS=N1 + NG + FCW,
        OUT_W=FCW + 2 * HG,
    )


def pack_weights(params, L):
    """One-time numpy weight packing -> bf16 slab (done at model init, not per call)."""
    S, T, R, A = L["S"], L["T"], L["R"], L["A"]
    w_conv = np.asarray(params["w_conv"], np.float32)          # (CO, R, 3)
    b_conv = np.asarray(params["b_conv"], np.float32)
    w_ih = np.asarray(params["w_ih"], np.float32)              # (4*HID, S + CO*T)
    w_hh = np.asarray(params["w_hh"], np.float32)              # (4*HID, HID)
    b_g = np.asarray(params["b_ih"], np.float32) + np.asarray(params["b_hh"], np.float32)
    w_fc = np.asarray(params["w_fc"], np.float32)              # (A, HID)
    b_fc = np.asarray(params["b_fc"], np.float32)

    # W1: banded im2col-free conv  [ref_flat | 1]  ->  conv pre-activations.
    W1 = np.zeros((L["K_G0"], L["N1"]), np.float32)
    for t in range(T):
        for k in range(3):
            h = t + k
            W1[h * R:(h + 1) * R, t * CO:(t + 1) * CO] = w_conv[:, :, k].T
    W1[L["CONV_ONE"], 0:T * CO] = np.tile(b_conv, T)            # conv bias (t*CO+co)

    # W2: [relu(conv) | state | h0 | 1] -> gates, one 128-lane group per gate [i,f,o,g].
    pt_blocks = [slice(0, HID), slice(HID, 2 * HID),            # i, f
                 slice(3 * HID, 4 * HID), slice(2 * HID, 3 * HID)]  # o, g
    W2 = np.zeros((L["N1"], L["NG"]), np.float32)
    d0 = L["DIR_OFF"]
    for gi, blk in enumerate(pt_blocks):
        col = gi * L["HG"]
        w_in = w_ih[blk]                                        # (HID, S + CO*T)
        conv_w = w_in[:, S:].reshape(HID, CO, T)                # PyTorch flatten = co*T + t
        W2[0:T * CO, col:col + HID] = conv_w.transpose(2, 1, 0).reshape(T * CO, HID)
        W2[d0:d0 + S, col:col + HID] = w_in[:, 0:S].T
        W2[d0 + S:d0 + S + HID, col:col + HID] = w_hh[blk].T
        W2[d0 + S + HID, col:col + HID] = b_g[blk]

    # FC: h_new group -> actions; bias parked in row HID.
    FC = np.zeros((L["HG"], L["FCW"]), np.float32)
    FC[0:HID, 0:A] = w_fc.T
    FC[HID, 0:A] = b_fc

    slab = np.zeros((L["W_ROWS"], L["W_COLS"]), np.float32)
    slab[0:L["K_G0"], 0:L["N1"]] = W1
    slab[0:L["N1"], L["W2_OFF"]:L["W2_OFF"] + L["NG"]] = W2
    slab[0:L["HG"], L["FC_OFF"]:L["FC_OFF"] + L["FCW"]] = FC
    return jnp.asarray(slab, dtype=jnp.bfloat16)


def _make_kernel(L):
    K_G0, N1, HG, NG = L["K_G0"], L["N1"], L["HG"], L["NG"]
    W2_OFF, FC_OFF, FCW = L["W2_OFF"], L["FC_OFF"], L["FCW"]

    def kernel(acts_ref, w_ref, out_ref):
        acts = acts_ref[...]                                     # (B_pad, K_ACTS) bf16

        # (1) Conv1d as one banded matmul (bias via the const-1 lane).
        conv = jnp.dot(acts[:, 0:K_G0], w_ref[0:K_G0, 0:N1],
                       preferred_element_type=jnp.float32)       # (B, N1) f32

        # (2) relu + lane-aligned add of [state | h0 | 1] (no relu mask needed:
        #     the direct lanes of `conv` are exactly zero by construction).
        direct = acts[:, K_G0:K_G0 + N1].astype(jnp.float32)
        h1 = (jnp.maximum(conv, 0.0) + direct).astype(jnp.bfloat16)

        # (3) All LSTMCell gate pre-activations; gates laid out as
        #     128-lane groups [i | f | o | g] so everything below is same-lane VPU work.
        gates = jnp.dot(h1, w_ref[0:N1, W2_OFF:W2_OFF + NG],
                        preferred_element_type=jnp.float32)      # (B, 4*HG) f32
        sig = jax.nn.sigmoid(gates[:, 0:3 * HG])
        i_g = sig[:, 0:HG]
        f_g = sig[:, HG:2 * HG]
        o_g = sig[:, 2 * HG:3 * HG]
        g_g = jnp.tanh(gates[:, 3 * HG:4 * HG])

        c0 = acts[:, K_G0 + N1:K_G0 + N1 + HG].astype(jnp.float32)  # c0 at lane 0 of its group
        c_new = f_g * c0 + i_g * g_g
        h_new = o_g * jnp.tanh(c_new)                            # pad lanes stay exactly 0

        # (4) fc_out (bias broadcast from slab row HID).
        out = jnp.dot(h_new.astype(jnp.bfloat16),
                      w_ref[0:HG, FC_OFF:FC_OFF + FCW],
                      preferred_element_type=jnp.float32)
        out = out + w_ref[HID:HID + 1, FC_OFF:FC_OFF + FCW].astype(jnp.float32)

        # (5) One aligned store: [fc_out | h_new | c_new], each 128-lane aligned.
        out_ref[...] = jnp.concatenate([out, h_new, c_new], axis=1)

    return kernel


def build_lstm_new(params, state_dim, horizon, ref_dim, nr_actions):
    """Pack weights once (numpy), return a jitted forward(state, ref, h0, c0)."""
    L = make_layout(state_dim, horizon, ref_dim, nr_actions)
    slab = pack_weights(params, L)          # bf16, computed ONCE at init
    kernel = _make_kernel(L)
    vmem = pl.BlockSpec(memory_space=pltpu.MemorySpace.VMEM)

    S, H, R, A = L["S"], L["H"], L["R"], L["A"]
    K_G0, N1, HG, FCW = L["K_G0"], L["N1"], L["HG"], L["FCW"]
    K_ACTS, OUT_W = L["K_ACTS"], L["OUT_W"]
    zmid_w = K_G0 + L["DIR_OFF"] - (H * R + 1)
    ztail_w = N1 - (L["DIR_OFF"] + S + HID + 1)

    @jax.jit
    def forward(state, ref, h0, c0):
        B = state.shape[0]
        B_pad = max(_round_up(B, 8), 8)
        dt = state.dtype
        ones = jnp.ones((B, 1), dt)
        # acts = [ref_flat | 1 | 0..0 | state | h0 | 1 | 0..0 | c0] + right/bottom zero pad
        acts = jnp.concatenate(
            [ref.reshape(B, H * R), ones, jnp.zeros((B, zmid_w), dt),
             state, h0, ones, jnp.zeros((B, ztail_w), dt), c0], axis=1)
        acts = jnp.pad(acts.astype(jnp.bfloat16),
                       ((0, B_pad - B), (0, K_ACTS - acts.shape[1])))

        packed = pl.pallas_call(
            kernel,
            out_shape=jax.ShapeDtypeStruct((B_pad, OUT_W), jnp.float32),
            in_specs=[vmem, vmem],
            out_specs=vmem,
        )(acts, slab)

        out = packed[:B, 0:A]
        h_new = packed[:B, FCW:FCW + HID]
        c_new = packed[:B, FCW + HG:FCW + HG + HID]
        return out, h_new, c_new

    return forward


def reference_forward(state, ref, params, h0, c0):
    """Pure-JAX mirror of the PyTorch forward (conv=True branch)."""
    refT = jnp.transpose(ref, (0, 2, 1))                  # (B, R, H), NCL like PyTorch
    w = params["w_conv"]                                  # (CO, R, 3)
    B, R, H = refT.shape
    T = H - 2
    conv = jnp.zeros((B, w.shape[0], T), jnp.float32)
    for k in range(3):
        conv = conv + jnp.einsum('brt,or->bot', refT[:, :, k:k + T], w[:, :, k])
    conv = jax.nn.relu(conv + params["b_conv"][None, :, None])
    conv_flat = conv.reshape(B, -1)                       # (B, CO*T), index = co*T + t
    x = jnp.concatenate([state, conv_flat], axis=1)
    gates = (x @ params["w_ih"].T + params["b_ih"]
             + h0 @ params["w_hh"].T + params["b_hh"])
    i, f, g, o = jnp.split(gates, 4, axis=1)
    c_new = jax.nn.sigmoid(f) * c0 + jax.nn.sigmoid(i) * jnp.tanh(g)
    h_new = jax.nn.sigmoid(o) * jnp.tanh(c_new)
    out = h_new @ params["w_fc"].T + params["b_fc"]
    return out, h_new, c_new


if __name__ == "__main__":
    # LSTM_NEW(state_dim=12, horizon=10, ref_dim=6, nr_actions_predict=4, conv=True); batch=2.
    B, S, H, R, A = 2, 12, 10, 6, 4
    T = H - 2
    D = S + CO * T                      # LSTMCell input dim

    key = jax.random.PRNGKey(0)
    ks = jax.random.split(key, 12)
    params = {
        "w_conv": 0.1 * jax.random.normal(ks[0], (CO, R, 3), jnp.float32),
        "b_conv": 0.1 * jax.random.normal(ks[1], (CO,), jnp.float32),
        "w_ih":   0.1 * jax.random.normal(ks[2], (4 * HID, D), jnp.float32),
        "w_hh":   0.1 * jax.random.normal(ks[3], (4 * HID, HID), jnp.float32),
        "b_ih":   0.1 * jax.random.normal(ks[4], (4 * HID,), jnp.float32),
        "b_hh":   0.1 * jax.random.normal(ks[5], (4 * HID,), jnp.float32),
        "w_fc":   0.1 * jax.random.normal(ks[6], (A, HID), jnp.float32),
        "b_fc":   0.1 * jax.random.normal(ks[7], (A,), jnp.float32),
    }
    state = jax.random.normal(ks[8], (B, S), jnp.float32)
    ref = jax.random.normal(ks[9], (B, H, R), jnp.float32)
    # reset_hidden_state(batch_size=B): randn hidden / cell state
    h0 = jax.random.normal(ks[10], (B, HID), jnp.float32)
    c0 = jax.random.normal(ks[11], (B, HID), jnp.float32)

    fwd = build_lstm_new(params, S, H, R, A)       # slab packed once here
    out, h_new, c_new = jax.block_until_ready(fwd(state, ref, h0, c0))

    out_r, h_r, c_r = reference_forward(state, ref, params, h0, c0)
    # bf16 weights/activations on the MXU -> allow ~1e-2 absolute error margin.
    np.testing.assert_allclose(np.asarray(out), np.asarray(out_r), rtol=2e-2, atol=2e-2)
    np.testing.assert_allclose(np.asarray(h_new), np.asarray(h_r), rtol=2e-2, atol=2e-2)
    np.testing.assert_allclose(np.asarray(c_new), np.asarray(c_r), rtol=2e-2, atol=2e-2)

    print("KERNEL_OK")
</pallas_src>

<mosaic_0001>
module attributes {stable_mosaic.version = 11 : i64} {
  func.func @kernel(%arg0: memref<8x512xbf16, #tpu.memory_space<vmem>>, %arg1: memref<256x896xbf16, #tpu.memory_space<vmem>>, %arg2: memref<8x384xf32, #tpu.memory_space<vmem>>) attributes {dimension_semantics = [], scalar_prefetch = 0 : i64, scratch_operands = 0 : i64, tpu.core_type = #tpu.core_type<tc>} {
    %c0 = arith.constant 0 : index
    %c0_0 = arith.constant 0 : index
    %0 = vector.load %arg0[%c0, %c0_0] : memref<8x512xbf16, #tpu.memory_space<vmem>>, vector<8x512xbf16>
    %1 = vector.extract_strided_slice %0 {offsets = [0, 0], sizes = [8, 128], strides = [1, 1]} : vector<8x512xbf16> to vector<8x128xbf16>
    %c0_1 = arith.constant 0 : index
    %c0_2 = arith.constant 0 : index
    %2 = vector.load %arg1[%c0_1, %c0_2] : memref<256x896xbf16, #tpu.memory_space<vmem>>, vector<128x256xbf16>
    %cst = arith.constant dense<0.000000e+00> : vector<8x256xf32>
    %3 = tpu.matmul %1, %2, %cst {dimension_numbers = #tpu.dot_dimension_numbers<[1], [0], [0], [1], [0, 0, 1, 1], [], []>} : vector<8x128xbf16>, vector<128x256xbf16>, vector<8x256xf32> -> vector<8x256xf32>
    %4 = vector.extract_strided_slice %0 {offsets = [0, 128], sizes = [8, 256], strides = [1, 1]} : vector<8x512xbf16> to vector<8x256xbf16>
    %5 = arith.extf %4 : vector<8x256xbf16> to vector<8x256xf32>
    %cst_3 = arith.constant 0.000000e+00 : f32
    %6 = vector.broadcast %cst_3 : f32 to vector<8x256xf32>
    %7 = arith.maximumf %3, %6 : vector<8x256xf32>
    %8 = arith.addf %7, %5 : vector<8x256xf32>
    %9 = arith.truncf %8 : vector<8x256xf32> to vector<8x256xbf16>
    %c0_4 = arith.constant 0 : index
    %c256 = arith.constant 256 : index
    %10 = vector.load %arg1[%c0_4, %c256] : memref<256x896xbf16, #tpu.memory_space<vmem>>, vector<256x512xbf16>
    %cst_5 = arith.constant dense<0.000000e+00> : vector<8x512xf32>
    %11 = tpu.matmul %9, %10, %cst_5 {dimension_numbers = #tpu.dot_dimension_numbers<[1], [0], [0], [1], [0, 0, 1, 1], [], []>} : vector<8x256xbf16>, vector<256x512xbf16>, vector<8x512xf32> -> vector<8x512xf32>
    %12 = vector.extract_strided_slice %11 {offsets = [0, 0], sizes = [8, 384], strides = [1, 1]} : vector<8x512xf32> to vector<8x384xf32>
    %13 = arith.negf %12 : vector<8x384xf32>
    %14 = math.exp %13 : vector<8x384xf32>
    %cst_6 = arith.constant 1.000000e+00 : f32
    %15 = vector.broadcast %cst_6 : f32 to vector<8x384xf32>
    %16 = arith.addf %15, %14 : vector<8x384xf32>
    %17 = arith.divf %15, %16 : vector<8x384xf32>
    %18 = vector.extract_strided_slice %17 {offsets = [0, 0], sizes = [8, 128], strides = [1, 1]} : vector<8x384xf32> to vector<8x128xf32>
    %19 = vector.extract_strided_slice %17 {offsets = [0, 128], sizes = [8, 128], strides = [1, 1]} : vector<8x384xf32> to vector<8x128xf32>
    %20 = vector.extract_strided_slice %17 {offsets = [0, 256], sizes = [8, 128], strides = [1, 1]} : vector<8x384xf32> to vector<8x128xf32>
    %21 = vector.extract_strided_slice %11 {offsets = [0, 384], sizes = [8, 128], strides = [1, 1]} : vector<8x512xf32> to vector<8x128xf32>
    %22 = math.tanh %21 : vector<8x128xf32>
    %23 = vector.extract_strided_slice %0 {offsets = [0, 384], sizes = [8, 128], strides = [1, 1]} : vector<8x512xbf16> to vector<8x128xbf16>
    %24 = arith.extf %23 : vector<8x128xbf16> to vector<8x128xf32>
    %25 = arith.mulf %19, %24 : vector<8x128xf32>
    %26 = arith.mulf %18, %22 : vector<8x128xf32>
    %27 = arith.addf %25, %26 : vector<8x128xf32>
    %28 = math.tanh %27 : vector<8x128xf32>
    %29 = arith.mulf %20, %28 : vector<8x128xf32>
    %30 = arith.truncf %29 : vector<8x128xf32> to vector<8x128xbf16>
    %c0_7 = arith.constant 0 : index
    %c768 = arith.constant 768 : index
    %31 = vector.load %arg1[%c0_7, %c768] : memref<256x896xbf16, #tpu.memory_space<vmem>>, vector<128x128xbf16>
    %cst_8 = arith.constant dense<0.000000e+00> : vector<8x128xf32>
    %32 = tpu.matmul %30, %31, %cst_8 {dimension_numbers = #tpu.dot_dimension_numbers<[1], [0], [0], [1], [0, 0, 1, 1], [], []>} : vector<8x128xbf16>, vector<128x128xbf16>, vector<8x128xf32> -> vector<8x128xf32>
    %c8 = arith.constant 8 : index
    %c768_9 = arith.constant 768 : index
    %33 = vector.load %arg1[%c8, %c768_9] : memref<256x896xbf16, #tpu.memory_space<vmem>>, vector<1x128xbf16>
    %34 = arith.extf %33 : vector<1x128xbf16> to vector<1x128xf32>
    %35 = vector.broadcast %34 : vector<1x128xf32> to vector<8x128xf32>
    %36 = arith.addf %32, %35 : vector<8x128xf32>
    %37 = tpu.concatenate %36, %29, %27 in 1 : vector<8x128xf32>, vector<8x128xf32>, vector<8x128xf32> -> vector<8x384xf32>
    %c0_10 = arith.constant 0 : index
    %c0_11 = arith.constant 0 : index
    %38 = vector.load %arg2[%c0_10, %c0_11] : memref<8x384xf32, #tpu.memory_space<vmem>>, vector<8x384xf32>
    tpu.vector_store %arg2[%c0_10, %c0_11], %37 {strides = array<i32>} : memref<8x384xf32, #tpu.memory_space<vmem>>, vector<8x384xf32>,
    return
  }
}

</mosaic_0001>

<llo_original>
// kernel: forward.1
$region0: #{forward.1}
  #allocation0 [shape = 'u32[]', space=smem, size = 0x4, offset = 0x4, fixed_abs, tag = 'smem constant byte address 0x4 - core index']
  #allocation1 [shape = 'u32[144,128]{1,0:T(1,128)}', space=vmem, size = 0x12000, scoped, tag = 'internal scratch']
  %s0 = inlined_call_operand.vmem [shape: bf16[8,512], index: 0, kind: input, shape index: {}]
  %s1 = inlined_call_operand.hbm [shape: bf16[256,896], index: 1, kind: input, shape index: {}]
  %s2 = inlined_call_operand.vmem [shape: f32[8,384], index: 2, kind: output, shape index: {}]
  %s3 = sld [smem:[#allocation0]]
  $region22: #{forward.1} parent=0
    _
  %s5 = ssub.s32 1, %s3
  %s6 = scalar_select 0, %s5, %s3
  $region1: #{forward.1} parent=0
    #allocation2 [shape = 'u8[458752]{0}', space=vmem, size = 0x70000, scoped, tag = 'input window, operand 1, single buffered']
    #allocation3 [shape = 's32[1]{0}', space=sflag, size = 0x4, scoped, tag = 'scoped memory for forward.1']
    %7 = vsyncpa [#allocation3], 0
    // Predicated region
    $region2: #{forward.1} parent=1 // pred_check
      _
    $region3: #{forward.1} parent=1 // pred_check_branch
      %9 = sbr.rel (0) target = $region5
    $region4: #{forward.1} parent=1 // pred_region
      _
    $region5: #{forward.1} parent=1 // pred_fallthru
      _
    // Predicated region
    $region6: #{forward.1} parent=1 // pred_check
      _
    $region7: #{forward.1} parent=1 // pred_check_branch
      %11 = sbr.rel (0) target = $region9
    $region8: #{forward.1} parent=1 // pred_region
      %s13 = ssub.s32 14336, 14336
      %14 = vsyncadd [#allocation3], %s13
      %s15 = sshll.u32 [#allocation2], 4
      %s16 = int_to_ptr.vmem [resolvable:$true] %s15
      %21 = dma.hbm_to_vmem [thread:$0]  %s1, 14336, %s16, [#allocation3], 448, 448, 28
    $region9: #{forward.1} parent=1 // pred_fallthru
      _
    // Predicated region
    $region10: #{forward.1} parent=1 // pred_check
      _
    $region11: #{forward.1} parent=1 // pred_check_branch
      %23 = sbr.rel (0) target = $region13
    $region12: #{forward.1} parent=1 // pred_region
      %24 = dma.done [#allocation3], 14336
    $region13: #{forward.1} parent=1 // pred_fallthru
      _
    %v26 = vld [vmem:[%s0] sm:$0xff]
    %v27 = vld [vmem:[%s0 + $0x8] sm:$0xff]
    %v28 = vld [vmem:[#allocation2] sm:$0xff]
    %v29 = vld [vmem:[#allocation2 + $0x1c] sm:$0xff]
    %v30 = vld [vmem:[#allocation2 + $0x38] sm:$0xff]
    %v31 = vld [vmem:[#allocation2 + $0x54] sm:$0xff]
    %v32 = vld [vmem:[#allocation2 + $0x70] sm:$0xff]
    %v33 = vld [vmem:[#allocation2 + $0x8c] sm:$0xff]
    %v34 = vld [vmem:[#allocation2 + $0xa8] sm:$0xff]
    %v35 = vld [vmem:[#allocation2 + $0xc4] sm:$0xff]
    %v36 = vld [vmem:[#allocation2 + $0xe0] sm:$0xff]
    %v37 = vld [vmem:[#allocation2 + $0xfc] sm:$0xff]
    %v38 = vld [vmem:[#allocation2 + $0x118] sm:$0xff]
    %v39 = vld [vmem:[#allocation2 + $0x134] sm:$0xff]
    %v40 = vld [vmem:[#allocation2 + $0x150] sm:$0xff]
    %v41 = vld [vmem:[#allocation2 + $0x16c] sm:$0xff]
    %v42 = vld [vmem:[#allocation2 + $0x188] sm:$0xff]
    %v43 = vld [vmem:[#allocation2 + $0x1a4] sm:$0xff]
    %v60 = vunpack.c.l.b16 %v28
    %v61 = vunpack.c.h.b16 %v28
    %v62 = vunpack.c.l.b16 %v29
    %v63 = vunpack.c.h.b16 %v29
    %v64 = vunpack.c.l.b16 %v30
    %v65 = vunpack.c.h.b16 %v30
    %v66 = vunpack.c.l.b16 %v31
    %v67 = vunpack.c.h.b16 %v31
    %v68 = vunpack.c.l.b16 %v32
    %v69 = vunpack.c.h.b16 %v32
    %v70 = vunpack.c.l.b16 %v33
    %v71 = vunpack.c.h.b16 %v33
    %v72 = vunpack.c.l.b16 %v34
    %v73 = vunpack.c.h.b16 %v34
    %v74 = vunpack.c.l.b16 %v35
    %v75 = vunpack.c.h.b16 %v35
    %v76 = vunpack.c.l.b16 %v36
    %v77 = vunpack.c.h.b16 %v36
    %v78 = vunpack.c.l.b16 %v37
    %v79 = vunpack.c.h.b16 %v37
    %v80 = vunpack.c.l.b16 %v38
    %v81 = vunpack.c.h.b16 %v38
    %v82 = vunpack.c.l.b16 %v39
    %v83 = vunpack.c.h.b16 %v39
    %v84 = vunpack.c.l.b16 %v40
    %v85 = vunpack.c.h.b16 %v40
    %v86 = vunpack.c.l.b16 %v41
    %v87 = vunpack.c.h.b16 %v41
    %v88 = vunpack.c.l.b16 %v42
    %v89 = vunpack.c.h.b16 %v42
    %v90 = vunpack.c.l.b16 %v43
    %v91 = vunpack.c.h.b16 %v43
    %v92 = vpack.c.b16 %v62, %v60
    %v93 = vpack.c.b16 %v63, %v61
    %v94 = vpack.c.b16 %v66, %v64
    %v95 = vpack.c.b16 %v67, %v65
    %v96 = vpack.c.b16 %v70, %v68
    %v97 = vpack.c.b16 %v71, %v69
    %v98 = vpack.c.b16 %v74, %v72
    %v99 = vpack.c.b16 %v75, %v73
    %v100 = vpack.c.b16 %v78, %v76
    %v101 = vpack.c.b16 %v79, %v77
    %v102 = vpack.c.b16 %v82, %v80
    %v103 = vpack.c.b16 %v83, %v81
    %v104 = vpack.c.b16 %v86, %v84
    %v105 = vpack.c.b16 %v87, %v85
    %v106 = vpack.c.b16 %v90, %v88
    %v107 = vpack.c.b16 %v91, %v89
    %124 = vmatprep.subr.bf16.mxu0 %v107
    %125 = vmatpush1.bf16.msra.mxu0 %v106
    %126 = vmatprep.subr.bf16.mxu0 %v105
    %127 = vmatpush1.bf16.msra.mxu0 %v104
    %128 = vmatprep.subr.bf16.mxu0 %v103
    %129 = vmatpush1.bf16.msra.mxu0 %v102
    %130 = vmatprep.subr.bf16.mxu0 %v101
    %131 = vmatpush1.bf16.msra.mxu0 %v100
    %132 = vmatprep.subr.bf16.mxu0 %v99
    %133 = vmatpush1.bf16.msra.mxu0 %v98
    %134 = vmatprep.subr.bf16.mxu0 %v97
    %135 = vmatpush1.bf16.msra.mxu0 %v96
    %136 = vmatprep.subr.bf16.mxu0 %v95
    %137 = vmatpush1.bf16.msra.mxu0 %v94
    %138 = vmatprep.subr.bf16.mxu0 %v93
    %139 = vmatpush1.bf16.msra.mxu0 %v92
    %140 = vmatprep.subr.bf16.mxu0 0
    %141 = vmatpush2.bf16.msra.mxu0 0
    %142 = vmatprep.subr.bf16.mxu0 0
    %143 = vmatpush2.bf16.msra.mxu0 0
    %144 = vmatprep.subr.bf16.mxu0 0
    %145 = vmatpush2.bf16.msra.mxu0 0
    %146 = vmatprep.subr.bf16.mxu0 0
    %147 = vmatpush2.bf16.msra.mxu0 0
    %148 = vmatprep.subr.bf16.mxu0 0
    %149 = vmatpush2.bf16.msra.mxu0 0
    %150 = vmatprep.subr.bf16.mxu0 0
    %151 = vmatpush2.bf16.msra.mxu0 0
    %152 = vmatprep.subr.bf16.mxu0 0
    %153 = vmatpush2.bf16.msra.mxu0 0
    %154 = vmatprep.subr.bf16.mxu0 0
    %155 = vmatpush2.bf16.msra.mxu0 0
    %156 = vmatprep.mubr.bf16.mxu0 0
    %157 = vmatmul.mubr.bf16.gmra.mxu0 %v26
    %v158 = vpop.f32.mrf.mxu0
    %v159 = vadd.f32 0.0, %v158
    %v160 = vpop.f32.mrf.mxu0
    %v161 = vadd.f32 0.0, %v160
    %v162 = vpop.f32.mrf.mxu0
    %v163 = vpop.f32.mrf.mxu0
    %164 = vdwg.mxu0
    %v167 = vrot.slane %v26, 4
    %v168 = vrot.slane %v27, 4
    %vm169 = vcmask 1043456
    %v170 = vsel %vm169, %v167, %v168
    %v172 = vunpack.c.l.bf16 %v170
    %v173 = vunpack.c.h.bf16 %v170
    %v174 = vmax.f32 %v159, 0.0
    %v175 = vmax.f32 %v161, 0.0
    %v176 = vadd.f32 %v174, %v172
    %v177 = vadd.f32 %v175, %v173
    %v178 = vpack.c.bf16 %v176, %v176
    %v179 = vpack.c.bf16 %v177, %v177
    %v180 = vld [vmem:[#allocation2 + $0x8] sm:$0xff]
    %v181 = vld [vmem:[#allocation2 + $0x10] sm:$0xff]
    %v182 = vld [vmem:[#allocation2 + $0x24] sm:$0xff]
    %v183 = vld [vmem:[#allocation2 + $0x2c] sm:$0xff]
    %v184 = vld [vmem:[#allocation2 + $0x40] sm:$0xff]
    %v185 = vld [vmem:[#allocation2 + $0x48] sm:$0xff]
    %v186 = vld [vmem:[#allocation2 + $0x5c] sm:$0xff]
    %v187 = vld [vmem:[#allocation2 + $0x64] sm:$0xff]
    %v188 = vld [vmem:[#allocation2 + $0x78] sm:$0xff]
    %v189 = vld [vmem:[#allocation2 + $0x80] sm:$0xff]
    %v190 = vld [vmem:[#allocation2 + $0x94] sm:$0xff]
    %v191 = vld [vmem:[#allocation2 + $0x9c] sm:$0xff]
    %v192 = vld [vmem:[#allocation2 + $0xb0] sm:$0xff]
    %v193 = vld [vmem:[#allocation2 + $0xb8] sm:$0xff]
    %v194 = vld [vmem:[#allocation2 + $0xcc] sm:$0xff]
    %v195 = vld [vmem:[#allocation2 + $0xd4] sm:$0xff]
    %v196 = vld [vmem:[#allocation2 + $0xe8] sm:$0xff]
    %v197 = vld [vmem:[#allocation2 + $0xf0] sm:$0xff]
    %v198 = vld [vmem:[#allocation2 + $0x104] sm:$0xff]
    %v199 = vld [vmem:[#allocation2 + $0x10c] sm:$0xff]
    %v200 = vld [vmem:[#allocation2 + $0x120] sm:$0xff]
    %v201 = vld [vmem:[#allocation2 + $0x128] sm:$0xff]
    %v202 = vld [vmem:[#allocation2 + $0x13c] sm:$0xff]
    %v203 = vld [vmem:[#allocation2 + $0x144] sm:$0xff]
    %v204 = vld [vmem:[#allocation2 + $0x158] sm:$0xff]
    %v205 = vld [vmem:[#allocation2 + $0x160] sm:$0xff]
    %v206 = vld [vmem:[#allocation2 + $0x174] sm:$0xff]
    %v207 = vld [vmem:[#allocation2 + $0x17c] sm:$0xff]
    %v208 = vld [vmem:[#allocation2 + $0x190] sm:$0xff]
    %v209 = vld [vmem:[#allocation2 + $0x198] sm:$0xff]
    %v210 = vld [vmem:[#allocation2 + $0x1ac] sm:$0xff]
    %v211 = vld [vmem:[#allocation2 + $0x1b4] sm:$0xff]
    %v212 = vld [vmem:[#allocation2 + $0x1c8] sm:$0xff]
    %v213 = vld [vmem:[#allocation2 + $0x1d0] sm:$0xff]
    %v214 = vld [vmem:[#allocation2 + $0x1e4] sm:$0xff]
    %v215 = vld [vmem:[#allocation2 + $0x1ec] sm:$0xff]
    %v216 = vld [vmem:[#allocation2 + $0x200] sm:$0xff]
    %v217 = vld [vmem:[#allocation2 + $0x208] sm:$0xff]
    %v218 = vld [vmem:[#allocation2 + $0x21c] sm:$0xff]
    %v219 = vld [vmem:[#allocation2 + $0x224] sm:$0xff]
    %v220 = vld [vmem:[#allocation2 + $0x238] sm:$0xff]
    %v221 = vld [vmem:[#allocation2 + $0x240] sm:$0xff]
    %v222 = vld [vmem:[#allocation2 + $0x254] sm:$0xff]
    %v223 = vld [vmem:[#allocation2 + $0x25c] sm:$0xff]
    %v224 = vld [vmem:[#allocation2 + $0x270] sm:$0xff]
    %v225 = vld [vmem:[#allocation2 + $0x278] sm:$0xff]
    %v226 = vld [vmem:[#allocation2 + $0x28c] sm:$0xff]
    %v227 = vld [vmem:[#allocation2 + $0x294] sm:$0xff]
    %v228 = vld [vmem:[#allocation2 + $0x2a8] sm:$0xff]
    %v229 = vld [vmem:[#allocation2 + $0x2b0] sm:$0xff]
    %v230 = vld [vmem:[#allocation2 + $0x2c4] sm:$0xff]
    %v231 = vld [vmem:[#allocation2 + $0x2cc] sm:$0xff]
    %v232 = vld [vmem:[#allocation2 + $0x2e0] sm:$0xff]
    %v233 = vld [vmem:[#allocation2 + $0x2e8] sm:$0xff]
    %v234 = vld [vmem:[#allocation2 + $0x2fc] sm:$0xff]
    %v235 = vld [vmem:[#allocation2 + $0x304] sm:$0xff]
    %v236 = vld [vmem:[#allocation2 + $0x318] sm:$0xff]
    %v237 = vld [vmem:[#allocation2 + $0x320] sm:$0xff]
    %v238 = vld [vmem:[#allocation2 + $0x334] sm:$0xff]
    %v239 = vld [vmem:[#allocation2 + $0x33c] sm:$0xff]
    %v240 = vld [vmem:[#allocation2 + $0x350] sm:$0xff]
    %v241 = vld [vmem:[#allocation2 + $0x358] sm:$0xff]
    %v242 = vld [vmem:[#allocation2 + $0x36c] sm:$0xff]
    %v243 = vld [vmem:[#allocation2 + $0x374] sm:$0xff]
    %v308 = vunpack.c.l.b16 %v180
    %v309 = vunpack.c.h.b16 %v180
    %v310 = vunpack.c.l.b16 %v181
    %v311 = vunpack.c.h.b16 %v181
    %v312 = vunpack.c.l.b16 %v182
    %v313 = vunpack.c.h.b16 %v182
    %v314 = vunpack.c.l.b16 %v183
    %v315 = vunpack.c.h.b16 %v183
    %v316 = vunpack.c.l.b16 %v184
    %v317 = vunpack.c.h.b16 %v184
    %v318 = vunpack.c.l.b16 %v185
    %v319 = vunpack.c.h.b16 %v185
    %v320 = vunpack.c.l.b16 %v186
    %v321 = vunpack.c.h.b16 %v186
    %v322 = vunpack.c.l.b16 %v187
    %v323 = vunpack.c.h.b16 %v187
    %v324 = vunpack.c.l.b16 %v188
    %v325 = vunpack.c.h.b16 %v188
    %v326 = vunpack.c.l.b16 %v189
    %v327 = vunpack.c.h.b16 %v189
    %v328 = vunpack.c.l.b16 %v190
    %v329 = vunpack.c.h.b16 %v190
    %v330 = vunpack.c.l.b16 %v191
    %v331 = vunpack.c.h.b16 %v191
    %v332 = vunpack.c.l.b16 %v192
    %v333 = vunpack.c.h.b16 %v192
    %v334 = vunpack.c.l.b16 %v193
    %v335 = vunpack.c.h.b16 %v193
    %v336 = vunpack.c.l.b16 %v194
    %v337 = vunpack.c.h.b16 %v194
    %v338 = vunpack.c.l.b16 %v195
    %v339 = vunpack.c.h.b16 %v195
    %v340 = vunpack.c.l.b16 %v196
    %v341 = vunpack.c.h.b16 %v196
    %v342 = vunpack.c.l.b16 %v197
    %v343 = vunpack.c.h.b16 %v197
    %v344 = vunpack.c.l.b16 %v198
    %v345 = vunpack.c.h.b16 %v198
    %v346 = vunpack.c.l.b16 %v199
    %v347 = vunpack.c.h.b16 %v199
    %v348 = vunpack.c.l.b16 %v200
    %v349 = vunpack.c.h.b16 %v200
    %v350 = vunpack.c.l.b16 %v201
    %v351 = vunpack.c.h.b16 %v201
    %v352 = vunpack.c.l.b16 %v202
    %v353 = vunpack.c.h.b16 %v202
    %v354 = vunpack.c.l.b16 %v203
    %v355 = vunpack.c.h.b16 %v203
    %v356 = vunpack.c.l.b16 %v204
    %v357 = vunpack.c.h.b16 %v204
    %v358 = vunpack.c.l.b16 %v205
    %v359 = vunpack.c.h.b16 %v205
    %v360 = vunpack.c.l.b16 %v206
    %v361 = vunpack.c.h.b16 %v206
    %v362 = vunpack.c.l.b16 %v207
    %v363 = vunpack.c.h.b16 %v207
    %v364 = vunpack.c.l.b16 %v208
    %v365 = vunpack.c.h.b16 %v208
    %v366 = vunpack.c.l.b16 %v209
    %v367 = vunpack.c.h.b16 %v209
    %v368 = vunpack.c.l.b16 %v210
    %v369 = vunpack.c.h.b16 %v210
    %v370 = vunpack.c.l.b16 %v211
    %v371 = vunpack.c.h.b16 %v211
    %v372 = vunpack.c.l.b16 %v212
    %v373 = vunpack.c.h.b16 %v212
    %v374 = vunpack.c.l.b16 %v213
    %v375 = vunpack.c.h.b16 %v213
    %v376 = vunpack.c.l.b16 %v214
    %v377 = vunpack.c.h.b16 %v214
    %v378 = vunpack.c.l.b16 %v215
    %v379 = vunpack.c.h.b16 %v215
    %v380 = vunpack.c.l.b16 %v216
    %v381 = vunpack.c.h.b16 %v216
    %v382 = vunpack.c.l.b16 %v217
    %v383 = vunpack.c.h.b16 %v217
    %v384 = vunpack.c.l.b16 %v218
    %v385 = vunpack.c.h.b16 %v218
    %v386 = vunpack.c.l.b16 %v219
    %v387 = vunpack.c.h.b16 %v219
    %v388 = vunpack.c.l.b16 %v220
    %v389 = vunpack.c.h.b16 %v220
    %v390 = vunpack.c.l.b16 %v221
    %v391 = vunpack.c.h.b16 %v221
    %v392 = vunpack.c.l.b16 %v222
    %v393 = vunpack.c.h.b16 %v222
    %v394 = vunpack.c.l.b16 %v223
    %v395 = vunpack.c.h.b16 %v223
    %v396 = vunpack.c.l.b16 %v224
    %v397 = vunpack.c.h.b16 %v224
    %v398 = vunpack.c.l.b16 %v225
    %v399 = vunpack.c.h.b16 %v225
    %v400 = vunpack.c.l.b16 %v226
    %v401 = vunpack.c.h.b16 %v226
    %v402 = vunpack.c.l.b16 %v227
    %v403 = vunpack.c.h.b16 %v227
    %v404 = vunpack.c.l.b16 %v228
    %v405 = vunpack.c.h.b16 %v228
    %v406 = vunpack.c.l.b16 %v229
    %v407 = vunpack.c.h.b16 %v229
    %v408 = vunpack.c.l.b16 %v230
    %v409 = vunpack.c.h.b16 %v230
    %v410 = vunpack.c.l.b16 %v231
    %v411 = vunpack.c.h.b16 %v231
    %v412 = vunpack.c.l.b16 %v232
    %v413 = vunpack.c.h.b16 %v232
    %v414 = vunpack.c.l.b16 %v233
    %v415 = vunpack.c.h.b16 %v233
    %v416 = vunpack.c.l.b16 %v234
    %v417 = vunpack.c.h.b16 %v234
    %v418 = vunpack.c.l.b16 %v235
    %v419 = vunpack.c.h.b16 %v235
    %v420 = vunpack.c.l.b16 %v236
    %v421 = vunpack.c.h.b16 %v236
    %v422 = vunpack.c.l.b16 %v237
    %v423 = vunpack.c.h.b16 %v237
    %v424 = vunpack.c.l.b16 %v238
    %v425 = vunpack.c.h.b16 %v238
    %v426 = vunpack.c.l.b16 %v239
    %v427 = vunpack.c.h.b16 %v239
    %v428 = vunpack.c.l.b16 %v240
    %v429 = vunpack.c.h.b16 %v240
    %v430 = vunpack.c.l.b16 %v241
    %v431 = vunpack.c.h.b16 %v241
    %v432 = vunpack.c.l.b16 %v242
    %v433 = vunpack.c.h.b16 %v242
    %v434 = vunpack.c.l.b16 %v243
    %v435 = vunpack.c.h.b16 %v243
    %v436 = vpack.c.b16 %v312, %v308
    %v437 = vpack.c.b16 %v313, %v309
    %v438 = vpack.c.b16 %v314, %v310
    %v439 = vpack.c.b16 %v315, %v311
    %v440 = vpack.c.b16 %v320, %v316
    %v441 = vpack.c.b16 %v321, %v317
    %v442 = vpack.c.b16 %v322, %v318
    %v443 = vpack.c.b16 %v323, %v319
    %v444 = vpack.c.b16 %v328, %v324
    %v445 = vpack.c.b16 %v329, %v325
    %v446 = vpack.c.b16 %v330, %v326
    %v447 = vpack.c.b16 %v331, %v327
    %v448 = vpack.c.b16 %v336, %v332
    %v449 = vpack.c.b16 %v337, %v333
    %v450 = vpack.c.b16 %v338, %v334
    %v451 = vpack.c.b16 %v339, %v335
    %v452 = vpack.c.b16 %v344, %v340
    %v453 = vpack.c.b16 %v345, %v341
    %v454 = vpack.c.b16 %v346, %v342
    %v455 = vpack.c.b16 %v347, %v343
    %v456 = vpack.c.b16 %v352, %v348
    %v457 = vpack.c.b16 %v353, %v349
    %v458 = vpack.c.b16 %v354, %v350
    %v459 = vpack.c.b16 %v355, %v351
    %v460 = vpack.c.b16 %v360, %v356
    %v461 = vpack.c.b16 %v361, %v357
    %v462 = vpack.c.b16 %v362, %v358
    %v463 = vpack.c.b16 %v363, %v359
    %v464 = vpack.c.b16 %v368, %v364
    %v465 = vpack.c.b16 %v369, %v365
    %v466 = vpack.c.b16 %v370, %v366
    %v467 = vpack.c.b16 %v371, %v367
    %v468 = vpack.c.b16 %v376, %v372
    %v469 = vpack.c.b16 %v377, %v373
    %v470 = vpack.c.b16 %v378, %v374
    %v471 = vpack.c.b16 %v379, %v375
    %v472 = vpack.c.b16 %v384, %v380
    %v473 = vpack.c.b16 %v385, %v381
    %v474 = vpack.c.b16 %v386, %v382
    %v475 = vpack.c.b16 %v387, %v383
    %v476 = vpack.c.b16 %v392, %v388
    %v477 = vpack.c.b16 %v393, %v389
    %v478 = vpack.c.b16 %v394, %v390
    %v479 = vpack.c.b16 %v395, %v391
    %v480 = vpack.c.b16 %v400, %v396
    %v481 = vpack.c.b16 %v401, %v397
    %v482 = vpack.c.b16 %v402, %v398
    %v483 = vpack.c.b16 %v403, %v399
    %v484 = vpack.c.b16 %v408, %v404
    %v485 = vpack.c.b16 %v409, %v405
    %v486 = vpack.c.b16 %v410, %v406
    %v487 = vpack.c.b16 %v411, %v407
    %v488 = vpack.c.b16 %v416, %v412
    %v489 = vpack.c.b16 %v417, %v413
    %v490 = vpack.c.b16 %v418, %v414
    %v491 = vpack.c.b16 %v419, %v415
    %v492 = vpack.c.b16 %v424, %v420
    %v493 = vpack.c.b16 %v425, %v421
    %v494 = vpack.c.b16 %v426, %v422
    %v495 = vpack.c.b16 %v427, %v423
    %v496 = vpack.c.b16 %v432, %v428
    %v497 = vpack.c.b16 %v433, %v429
    %v498 = vpack.c.b16 %v434, %v430
    %v499 = vpack.c.b16 %v435, %v431
    %564 = vmatprep.subr.bf16.mxu0 %v465
    %565 = vmatpush1.bf16.msra.mxu0 %v464
    %566 = vmatprep.subr.bf16.mxu0 %v461
    %567 = vmatpush1.bf16.msra.mxu0 %v460
    %568 = vmatprep.subr.bf16.mxu0 %v457
    %569 = vmatpush1.bf16.msra.mxu0 %v456
    %570 = vmatprep.subr.bf16.mxu0 %v453
    %571 = vmatpush1.bf16.msra.mxu0 %v452
    %572 = vmatprep.subr.bf16.mxu0 %v449
    %573 = vmatpush1.bf16.msra.mxu0 %v448
    %574 = vmatprep.subr.bf16.mxu0 %v445
    %575 = vmatpush1.bf16.msra.mxu0 %v444
    %576 = vmatprep.subr.bf16.mxu0 %v441
    %577 = vmatpush1.bf16.msra.mxu0 %v440
    %578 = vmatprep.subr.bf16.mxu0 %v437
    %579 = vmatpush1.bf16.msra.mxu0 %v436
    %580 = vmatprep.subr.bf16.mxu0 %v497
    %581 = vmatpush2.bf16.msra.mxu0 %v496
    %582 = vmatprep.subr.bf16.mxu0 %v493
    %583 = vmatpush2.bf16.msra.mxu0 %v492
    %584 = vmatprep.subr.bf16.mxu0 %v489
    %585 = vmatpush2.bf16.msra.mxu0 %v488
    %586 = vmatprep.subr.bf16.mxu0 %v485
    %587 = vmatpush2.bf16.msra.mxu0 %v484
    %588 = vmatprep.subr.bf16.mxu0 %v481
    %589 = vmatpush2.bf16.msra.mxu0 %v480
    %590 = vmatprep.subr.bf16.mxu0 %v477
    %591 = vmatpush2.bf16.msra.mxu0 %v476
    %592 = vmatprep.subr.bf16.mxu0 %v473
    %593 = vmatpush2.bf16.msra.mxu0 %v472
    %594 = vmatprep.subr.bf16.mxu0 %v469
    %595 = vmatpush2.bf16.msra.mxu0 %v468
    %596 = vmatprep.mubr.bf16.mxu0 %v179
    %597 = vmatmul.mubr.bf16.gmra.mxu0 %v178
    %v598 = vpop.f32.mrf.mxu0
    %v599 = vadd.f32 0.0, %v598
    %v600 = vpop.f32.mrf.mxu0
    %v601 = vadd.f32 0.0, %v600
    %v602 = vpop.f32.mrf.mxu0
    %v603 = vpop.f32.mrf.mxu0
    %604 = vdwg.mxu0
    %605 = vmatprep.subr.bf16.mxu0 %v467
    %606 = vmatpush1.bf16.msra.mxu0 %v466
    %607 = vmatprep.subr.bf16.mxu0 %v463
    %608 = vmatpush1.bf16.msra.mxu0 %v462
    %609 = vmatprep.subr.bf16.mxu0 %v459
    %610 = vmatpush1.bf16.msra.mxu0 %v458
    %611 = vmatprep.subr.bf16.mxu0 %v455
    %612 = vmatpush1.bf16.msra.mxu0 %v454
    %613 = vmatprep.subr.bf16.mxu0 %v451
    %614 = vmatpush1.bf16.msra.mxu0 %v450
    %615 = vmatprep.subr.bf16.mxu0 %v447
    %616 = vmatpush1.bf16.msra.mxu0 %v446
    %617 = vmatprep.subr.bf16.mxu0 %v443
    %618 = vmatpush1.bf16.msra.mxu0 %v442
    %619 = vmatprep.subr.bf16.mxu0 %v439
    %620 = vmatpush1.bf16.msra.mxu0 %v438
    %621 = vmatprep.subr.bf16.mxu0 %v499
    %622 = vmatpush2.bf16.msra.mxu0 %v498
    %623 = vmatprep.subr.bf16.mxu0 %v495
    %624 = vmatpush2.bf16.msra.mxu0 %v494
    %625 = vmatprep.subr.bf16.mxu0 %v491
    %626 = vmatpush2.bf16.msra.mxu0 %v490
    %627 = vmatprep.subr.bf16.mxu0 %v487
    %628 = vmatpush2.bf16.msra.mxu0 %v486
    %629 = vmatprep.subr.bf16.mxu0 %v483
    %630 = vmatpush2.bf16.msra.mxu0 %v482
    %631 = vmatprep.subr.bf16.mxu0 %v479
    %632 = vmatpush2.bf16.msra.mxu0 %v478
    %633 = vmatprep.subr.bf16.mxu0 %v475
    %634 = vmatpush2.bf16.msra.mxu0 %v474
    %635 = vmatprep.subr.bf16.mxu0 %v471
    %636 = vmatpush2.bf16.msra.mxu0 %v470
    %637 = vmatprep.mubr.bf16.mxu0 %v179
    %638 = vmatmul.mubr.bf16.gmra.mxu0 %v178
    %v639 = vpop.f32.mrf.mxu0
    %v640 = vadd.f32 0.0, %v639
    %v641 = vpop.f32.mrf.mxu0
    %v642 = vadd.f32 0.0, %v641
    %v643 = vpop.f32.mrf.mxu0
    %v644 = vpop.f32.mrf.mxu0
    %645 = vdwg.mxu0
    %v646 = vxor.u32 %v599, 2147483648
    %v647 = vxor.u32 %v601, 2147483648
    %v648 = vxor.u32 %v640, 2147483648
    %v649 = vmul.f32 %v646, 1.442695
    %v650 = vpow.pop %v649
    %v651 = vmul.f32 %v647, 1.442695
    %v652 = vpow.pop %v651
    %v653 = vmul.f32 %v648, 1.442695
    %v654 = vpow.pop %v653
    %v655 = vadd.f32 %v650, 1.0
    %v656 = vadd.f32 %v652, 1.0
    %v657 = vadd.f32 %v654, 1.0
    %v658 = vrcp.pop %v655
    %v659 = vmul.f32 1.0, %v658
    %v660 = vrcp.pop %v656
    %v661 = vmul.f32 1.0, %v660
    %v662 = vrcp.pop %v657
    %v663 = vmul.f32 1.0, %v662
    %v664 = vtanh.pop %v642
    %v666 = vunpack.c.l.bf16 %v168
    %v667 = vmul.f32 %v661, %v666
    %v668 = vmul.f32 %v659, %v664
    %v669 = vadd.f32 %v667, %v668
    %v670 = vtanh.pop %v669
    %v671 = vmul.f32 %v663, %v670
    %v672 = vpack.c.bf16 %v671, %v671
    %v673 = vld [vmem:[#allocation2 + $0x18] sm:$0xf]
    %v674 = vld [vmem:[#allocation2 + $0x34] sm:$0xf]
    %v675 = vld [vmem:[#allocation2 + $0x50] sm:$0xf]
    %v676 = vld [vmem:[#allocation2 + $0x6c] sm:$0xf]
    %v677 = vld [vmem:[#allocation2 + $0x88] sm:$0xf]
    %v678 = vld [vmem:[#allocation2 + $0xa4] sm:$0xf]
    %v679 = vld [vmem:[#allocation2 + $0xc0] sm:$0xf]
    %v680 = vld [vmem:[#allocation2 + $0xdc] sm:$0xf]
    %v681 = vld [vmem:[#allocation2 + $0xf8] sm:$0xf]
    %v682 = vld [vmem:[#allocation2 + $0x114] sm:$0xf]
    %v683 = vld [vmem:[#allocation2 + $0x130] sm:$0xf]
    %v684 = vld [vmem:[#allocation2 + $0x14c] sm:$0xf]
    %v685 = vld [vmem:[#allocation2 + $0x168] sm:$0xf]
    %v686 = vld [vmem:[#allocation2 + $0x184] sm:$0xf]
    %v687 = vld [vmem:[#allocation2 + $0x1a0] sm:$0xf]
    %v688 = vld [vmem:[#allocation2 + $0x1bc] sm:$0xf]
    %v689 = vld [vmem:[#allocation2 + $0x34] sm:$0x1]
    %v690 = vunpack.c.l.bf16 %v689
    %v691 = vlaneseq
    %v692 = vshrl.u32 %v691, 7
    %v693 = vsub.s32 0, %v692
    %v694 = vrot.slane %v690, %v693
    %v711 = vunpack.c.l.b16 %v673
    %v712 = vunpack.c.l.b16 %v674
    %v713 = vunpack.c.l.b16 %v675
    %v714 = vunpack.c.l.b16 %v676
    %v715 = vunpack.c.l.b16 %v677
    %v716 = vunpack.c.l.b16 %v678
    %v717 = vunpack.c.l.b16 %v679
    %v718 = vunpack.c.l.b16 %v680
    %v719 = vunpack.c.l.b16 %v681
    %v720 = vunpack.c.l.b16 %v682
    %v721 = vunpack.c.l.b16 %v683
    %v722 = vunpack.c.l.b16 %v684
    %v723 = vunpack.c.l.b16 %v685
    %v724 = vunpack.c.l.b16 %v686
    %v725 = vunpack.c.l.b16 %v687
    %v726 = vunpack.c.l.b16 %v688
    %v727 = vpack.c.b16 %v712, %v711
    %v728 = vpack.c.b16 %v714, %v713
    %v729 = vpack.c.b16 %v716, %v715
    %v730 = vpack.c.b16 %v718, %v717
    %v731 = vpack.c.b16 %v720, %v719
    %v732 = vpack.c.b16 %v722, %v721
    %v733 = vpack.c.b16 %v724, %v723
    %v734 = vpack.c.b16 %v726, %v725
    %743 = vmatprep.subr.bf16.mxu0 0
    %744 = vmatpush1.bf16.msra.mxu0 %v734
    %745 = vmatprep.subr.bf16.mxu0 0
    %746 = vmatpush1.bf16.msra.mxu0 %v733
    %747 = vmatprep.subr.bf16.mxu0 0
    %748 = vmatpush1.bf16.msra.mxu0 %v732
    %749 = vmatprep.subr.bf16.mxu0 0
    %750 = vmatpush1.bf16.msra.mxu0 %v731
    %751 = vmatprep.subr.bf16.mxu0 0
    %752 = vmatpush1.bf16.msra.mxu0 %v730
    %753 = vmatprep.subr.bf16.mxu0 0
    %754 = vmatpush1.bf16.msra.mxu0 %v729
    %755 = vmatprep.subr.bf16.mxu0 0
    %756 = vmatpush1.bf16.msra.mxu0 %v728
    %757 = vmatprep.subr.bf16.mxu0 0
    %758 = vmatpush1.bf16.msra.mxu0 %v727
    %759 = vmatprep.subr.bf16.mxu0 0
    %760 = vmatpush2.bf16.msra.mxu0 0
    %761 = vmatprep.subr.bf16.mxu0 0
    %762 = vmatpush2.bf16.msra.mxu0 0
    %763 = vmatprep.subr.bf16.mxu0 0
    %764 = vmatpush2.bf16.msra.mxu0 0
    %765 = vmatprep.subr.bf16.mxu0 0
    %766 = vmatpush2.bf16.msra.mxu0 0
    %767 = vmatprep.subr.bf16.mxu0 0
    %768 = vmatpush2.bf16.msra.mxu0 0
    %769 = vmatprep.subr.bf16.mxu0 0
    %770 = vmatpush2.bf16.msra.mxu0 0
    %771 = vmatprep.subr.bf16.mxu0 0
    %772 = vmatpush2.bf16.msra.mxu0 0
    %773 = vmatprep.subr.bf16.mxu0 0
    %774 = vmatpush2.bf16.msra.mxu0 0
    %775 = vmatprep.mubr.bf16.mxu0 0
    %776 = vmatmul.mubr.bf16.gmra.mxu0 %v672
    %v777 = vpop.f32.mrf.mxu0
    %v778 = vadd.f32 %v694, %v777
    %v779 = vpop.f32.mrf.mxu0
    %v780 = vpop.f32.mrf.mxu0
    %v781 = vpop.f32.mrf.mxu0
    %782 = vdwg.mxu0
    %783 = vst [vmem:[%s2] sm:$0xff] %v778
    %784 = vst [vmem:[%s2 + $0x8] sm:$0xff] %v671
    %785 = vst [vmem:[%s2 + $0x10] sm:$0xff] %v669
    // Predicated region
    $region14: #{forward.1} parent=1 // pred_check
      _
    $region15: #{forward.1} parent=1 // pred_check_branch
      %787 = sbr.rel (0) target = $region17
    $region16: #{forward.1} parent=1 // pred_region
      _
    $region17: #{forward.1} parent=1 // pred_fallthru
      _
    // Predicated region
    $region18: #{forward.1} parent=1 // pred_check
      _
    $region19: #{forward.1} parent=1 // pred_check_branch
      %789 = sbr.rel (0) target = $region21
    $region20: #{forward.1} parent=1 // pred_region
      _
    $region21: #{forward.1} parent=1 // pred_fallthru
      _
    %790 = vsyncpa [#allocation3], 1

</llo_original>
